<compile_context>
chip_gen: v5e
topology: v5e:2x2
jax: 0.10.0
libtpu: 0.0.40
codegen_flags: <defaults>
</compile_context>

<pallas_src>
import functools
import math

import jax
import jax.numpy as jnp
import numpy as np
from jax import lax
from jax.experimental import pallas as pl
from jax.experimental.pallas import tpu as pltpu


def _round_up(x: int, m: int) -> int:
    return ((x + m - 1) // m) * m


def _kernel_filter_kernel(gcur_ref, gprev_ref, gnext_ref, k_ref, o_ref, *,
                          K, D, H, W, TH, HB):
    """Computes one (batch, H-tile, C-tile) output block.

    gcur_ref  : (1, C_t, TH, Wp)  current H-tile of the input
    gprev_ref : (1, C_t, HB, Wp)  HB rows just above the tile (clamped at top)
    gnext_ref : (1, C_t, HB, Wp)  HB rows just below the tile (clamped at bottom)
    k_ref     : (1, K*K, TH, Wp)  per-pixel filter weights for this H-tile
    o_ref     : (1, C_t, TH, Wp)  output block
    """
    h = pl.program_id(1)
    half = K // 2
    C_t = gcur_ref.shape[1]
    Wp = o_ref.shape[3]
    L = TH + 2 * HB

    # ---- build the masked f32 extended tile once per step (no per-tap masks) ---
    # Row r of `ext` is *intended* to be global image row  h*TH - HB + r.
    # Rows outside [0, H) (top/bottom zero padding, clamped halo blocks, ragged
    # bottom tile) and lanes >= W (ragged width / lane padding) are zeroed here,
    # so the tap loop below is pure shift + multiply + add.
    ext = jnp.concatenate(
        [gprev_ref[0], gcur_ref[0], gnext_ref[0]], axis=1).astype(jnp.float32)
    row = lax.broadcasted_iota(jnp.int32, (L, Wp), 0) + (h * TH - HB)
    col = lax.broadcasted_iota(jnp.int32, (L, Wp), 1)
    keep = (row >= 0) & (row < H) & (col < W)
    ext = jnp.where(keep[None, :, :], ext, 0.0)

    # ---- chunked register accumulation: one store per 8-row output chunk ------
    for r0 in range(0, TH, 8):
        acc = None
        for i in range(K):
            s = HB + D * (i - half)                    # static, 0 <= s, r0+s+8 <= L
            rows = ext[:, r0 + s:r0 + s + 8, :]        # (C_t, 8, Wp) chunk
            for j in range(K):
                dx = D * (j - half)
                if dx == 0:
                    shifted = rows
                else:
                    # Lane wrap only touches zeroed padding (Wp - W >= halo) or
                    # lanes >= W of the output chunk, which are never written back.
                    shifted = jnp.roll(rows, -dx, axis=2)
                w = k_ref[0, i * K + j, r0:r0 + 8, :].astype(jnp.float32)
                term = shifted * w[None, :, :]
                acc = term if acc is None else acc + term
        o_ref[0, :, r0:r0 + 8, :] = acc.astype(o_ref.dtype)


def kernel_filter(grid, kernel, dilation: int = 1, *, c_tile=None, h_tile: int = 128):
    """Pallas forward pass matching KernelFilterClass.forward(grid, kernel, dilation)."""
    N, C, H, W = grid.shape
    KK = kernel.shape[1]
    K = int(round(math.sqrt(KK)))
    assert K * K == KK, "kernel channel dim must be a perfect square (K*K)"
    assert kernel.shape == (N, KK, H, W)
    D = int(dilation)
    halo = D * (K // 2)

    isz = jnp.dtype(grid.dtype).itemsize
    sub = {4: 8, 2: 16, 1: 32}.get(isz, 8)       # min sublane tile for the dtype
    HB = _round_up(max(halo, 1), sub)            # halo block height

    # Lane-dense last dim with >= halo columns of (zero-masked) padding so lane
    # rolls never wrap real data into valid outputs.
    Wp = _round_up(W, 128)
    while Wp - W < halo:
        Wp += 128

    # Channel tile: largest divisor of C up to 16.
    if c_tile is None:
        c_tile = 1
        for d in range(1, min(C, 16) + 1):
            if C % d == 0:
                c_tile = d
    assert C % c_tile == 0, "c_tile must divide C"
    C_t = c_tile

    # ---- VMEM-aware H-tile choice -------------------------------------------
    try:
        vmem_cap = int(pltpu.get_tpu_info().vmem_capacity_bytes)
    except Exception:
        vmem_cap = 64 * 2**20                     # conservative (v7x per-TC)
    budget = max(8 << 20, min(40 << 20, int(0.30 * vmem_cap)))

    # bytes(TH) ~= a*TH + b : double-buffered pipeline blocks + f32 ext temp.
    a = Wp * (2 * isz * (2 * C_t + KK) + 8 * C_t)
    b = Wp * 2 * HB * C_t * (2 * isz + 4)
    th_fit = max(HB, ((budget - b) // max(a, 1)) // HB * HB)

    # Bound fully-unrolled code size (~<=160 tap bodies per grid step).
    th_code = max(1, 160 // (K * K)) * 8
    th_code = max(HB, (th_code // HB) * HB)

    TH = max(HB, min(_round_up(max(h_tile, 1), HB), _round_up(H, HB),
                     th_fit, th_code))
    TB = TH // HB                                 # H-tile height in halo blocks
    nH = pl.cdiv(H, TH)
    n_hb = pl.cdiv(H, HB)                         # number of halo blocks along H
    nC = C // C_t

    body = functools.partial(_kernel_filter_kernel,
                             K=K, D=D, H=H, W=W, TH=TH, HB=HB)

    blocks = isz * Wp * (2 * C_t * TH + 2 * C_t * HB + KK * TH)
    temps = 4 * Wp * (C_t * (2 * TH + 2 * HB) + 3 * (TH + 2 * HB))
    vmem_limit = int(min(0.75 * vmem_cap,
                         max(32 << 20, 2 * blocks + temps + (8 << 20))))

    out = pl.pallas_call(
        body,
        out_shape=jax.ShapeDtypeStruct((N, C, H, W), grid.dtype),
        grid=(N, nH, nC),
        in_specs=[
            # current H tile of the input
            pl.BlockSpec((1, C_t, TH, Wp), lambda n, h, c: (n, c, h, 0)),
            # HB rows just above the tile (clamped at the top edge; masked in-kernel)
            pl.BlockSpec((1, C_t, HB, Wp),
                         lambda n, h, c: (n, c, jnp.maximum(h * TB - 1, 0), 0)),
            # HB rows just below the tile (clamped at the bottom edge; masked in-kernel)
            pl.BlockSpec((1, C_t, HB, Wp),
                         lambda n, h, c: (n, c, jnp.minimum((h + 1) * TB, n_hb - 1), 0)),
            # per-pixel kernel weights for this H tile (resident across the c axis)
            pl.BlockSpec((1, KK, TH, Wp), lambda n, h, c: (n, 0, h, 0)),
        ],
        out_specs=pl.BlockSpec((1, C_t, TH, Wp), lambda n, h, c: (n, c, h, 0)),
        compiler_params=pltpu.CompilerParams(
            dimension_semantics=("parallel", "parallel", "arbitrary"),
            vmem_limit_bytes=vmem_limit,
        ),
    )(grid, grid, grid, kernel)
    return out


def _reference(grid, kernel, dilation=1):
    """Pure-JAX reference for correctness checking."""
    N, C, H, W = grid.shape
    KK = kernel.shape[1]
    K = int(round(math.sqrt(KK)))
    pad = dilation * (K // 2)
    gpad = jnp.pad(grid, ((0, 0), (0, 0), (pad, pad), (pad, pad)))
    out = jnp.zeros((N, C, H, W), dtype=jnp.float32)
    t = 0
    for i in range(K):
        for j in range(K):
            patch = gpad[:, :, i * dilation:i * dilation + H,
                               j * dilation:j * dilation + W]
            w = kernel[:, t, :, :][:, None, :, :]
            out = out + patch.astype(jnp.float32) * w.astype(jnp.float32)
            t += 1
    return out.astype(grid.dtype)


if __name__ == "__main__":
    key = jax.random.PRNGKey(0)
    k0, k1, k2, k3 = jax.random.split(key, 4)

    # Small deterministic inputs: N=2, C=4, H=W=16, 3x3 per-pixel kernels.
    N, C, H, W, K = 2, 4, 16, 16, 3
    grid_in = jax.random.normal(k0, (N, C, H, W), dtype=jnp.float32)
    kern_in = jax.random.normal(k1, (N, K * K, H, W), dtype=jnp.float32)

    # (dilation, h_tile): h_tile=8 forces 2 H-tiles so the halo-stitch path is
    # exercised; h_tile=128 exercises the single-tile path.
    for dil, ht in ((1, 8), (2, 8), (1, 128)):
        out = jax.block_until_ready(kernel_filter(grid_in, kern_in, dil, h_tile=ht))
        ref = jax.block_until_ready(_reference(grid_in, kern_in, dil))
        assert out.shape == (N, C, H, W)
        np.testing.assert_allclose(np.asarray(out), np.asarray(ref),
                                   rtol=1e-5, atol=1e-5)

    # Ragged shapes (H, W not multiples of 8/128; C=3) exercise the OOB-block
    # masking path with no host-side padding.
    N2, C2, H2, W2 = 1, 3, 13, 20
    g2 = jax.random.normal(k2, (N2, C2, H2, W2), dtype=jnp.float32)
    kk2 = jax.random.normal(k3, (N2, K * K, H2, W2), dtype=jnp.float32)
    out2 = jax.block_until_ready(kernel_filter(g2, kk2, 2, h_tile=8))
    ref2 = jax.block_until_ready(_reference(g2, kk2, 2))
    np.testing.assert_allclose(np.asarray(out2), np.asarray(ref2),
                               rtol=1e-5, atol=1e-5)

    print("KERNEL_OK")
</pallas_src>

<mosaic_0001>
module attributes {stable_mosaic.version = 11 : i64} {
  func.func @_kernel_filter_kernel(%arg0: i32, %arg1: i32, %arg2: i32, %arg3: memref<1x4x8x128xf32, #tpu.memory_space<vmem>>, %arg4: memref<1x4x8x128xf32, #tpu.memory_space<vmem>>, %arg5: memref<1x4x8x128xf32, #tpu.memory_space<vmem>>, %arg6: memref<1x9x8x128xf32, #tpu.memory_space<vmem>>, %arg7: memref<1x4x8x128xf32, #tpu.memory_space<vmem>>) attributes {dimension_semantics = [#tpu.dimension_semantics<parallel>, #tpu.dimension_semantics<parallel>, #tpu.dimension_semantics<arbitrary>], iteration_bounds = array<i64: 2, 2, 1>, scalar_prefetch = 0 : i64, scratch_operands = 0 : i64, tpu.core_type = #tpu.core_type<tc>, window_params = [{transform_indices = @transform_0, window_bounds = array<i64: 1, 4, 8, 128>}, {transform_indices = @transform_1, window_bounds = array<i64: 1, 4, 8, 128>}, {transform_indices = @transform_2, window_bounds = array<i64: 1, 4, 8, 128>}, {transform_indices = @transform_3, window_bounds = array<i64: 1, 9, 8, 128>}, {transform_indices = @transform_4, window_bounds = array<i64: 1, 4, 8, 128>}]} {
    %c0 = arith.constant 0 : index
    %c0_0 = arith.constant 0 : index
    %c0_1 = arith.constant 0 : index
    %c0_2 = arith.constant 0 : index
    %0 = vector.load %arg4[%c0, %c0_0, %c0_1, %c0_2] : memref<1x4x8x128xf32, #tpu.memory_space<vmem>>, vector<1x4x8x128xf32>
    %1 = vector.shape_cast %0 : vector<1x4x8x128xf32> to vector<4x8x128xf32>
    %c0_3 = arith.constant 0 : index
    %c0_4 = arith.constant 0 : index
    %c0_5 = arith.constant 0 : index
    %c0_6 = arith.constant 0 : index
    %2 = vector.load %arg3[%c0_3, %c0_4, %c0_5, %c0_6] : memref<1x4x8x128xf32, #tpu.memory_space<vmem>>, vector<1x4x8x128xf32>
    %3 = vector.shape_cast %2 : vector<1x4x8x128xf32> to vector<4x8x128xf32>
    %c0_7 = arith.constant 0 : index
    %c0_8 = arith.constant 0 : index
    %c0_9 = arith.constant 0 : index
    %c0_10 = arith.constant 0 : index
    %4 = vector.load %arg5[%c0_7, %c0_8, %c0_9, %c0_10] : memref<1x4x8x128xf32, #tpu.memory_space<vmem>>, vector<1x4x8x128xf32>
    %5 = vector.shape_cast %4 : vector<1x4x8x128xf32> to vector<4x8x128xf32>
    %6 = tpu.concatenate %1, %3, %5 in 1 : vector<4x8x128xf32>, vector<4x8x128xf32>, vector<4x8x128xf32> -> vector<4x24x128xf32>
    %7 = tpu.iota {dimensions = array<i32: 0>} : vector<24x128xi32>
    %c8_i32 = arith.constant 8 : i32
    %8 = arith.muli %arg1, %c8_i32 : i32
    %c8_i32_11 = arith.constant 8 : i32
    %9 = arith.subi %8, %c8_i32_11 : i32
    %10 = vector.broadcast %9 : i32 to vector<24x128xi32>
    %11 = arith.addi %7, %10 : vector<24x128xi32>
    %12 = tpu.iota {dimensions = array<i32: 1>} : vector<24x128xi32>
    %c0_i32 = arith.constant 0 : i32
    %13 = vector.broadcast %c0_i32 : i32 to vector<24x128xi32>
    %14 = arith.cmpi sge, %11, %13 : vector<24x128xi32>
    %c16_i32 = arith.constant 16 : i32
    %15 = vector.broadcast %c16_i32 : i32 to vector<24x128xi32>
    %16 = arith.cmpi slt, %11, %15 : vector<24x128xi32>
    %17 = arith.andi %14, %16 : vector<24x128xi1>
    %c16_i32_12 = arith.constant 16 : i32
    %18 = vector.broadcast %c16_i32_12 : i32 to vector<24x128xi32>
    %19 = arith.cmpi slt, %12, %18 : vector<24x128xi32>
    %20 = arith.andi %17, %19 : vector<24x128xi1>
    %21 = vector.shape_cast %20 : vector<24x128xi1> to vector<1x24x128xi1>
    %cst = arith.constant 0.000000e+00 : f32
    %22 = vector.shape_cast %21 : vector<1x24x128xi1> to vector<1x24x128xi1>
    %23 = vector.broadcast %22 : vector<1x24x128xi1> to vector<4x24x128xi1>
    %24 = vector.broadcast %cst : f32 to vector<4x24x128xf32>
    %25 = arith.select %23, %6, %24 : vector<4x24x128xi1>, vector<4x24x128xf32>
    %26 = vector.extract_strided_slice %25 {offsets = [0, 7, 0], sizes = [4, 8, 128], strides = [1, 1, 1]} : vector<4x24x128xf32> to vector<4x8x128xf32>
    %27 = vector.extract_strided_slice %26 {offsets = [0, 0, 127], sizes = [4, 8, 1], strides = [1, 1, 1]} : vector<4x8x128xf32> to vector<4x8x1xf32>
    %28 = vector.extract_strided_slice %26 {offsets = [0, 0, 0], sizes = [4, 8, 127], strides = [1, 1, 1]} : vector<4x8x128xf32> to vector<4x8x127xf32>
    %29 = tpu.concatenate %27, %28 in 2 : vector<4x8x1xf32>, vector<4x8x127xf32> -> vector<4x8x128xf32>
    %c0_13 = arith.constant 0 : index
    %c0_14 = arith.constant 0 : index
    %c0_15 = arith.constant 0 : index
    %c0_16 = arith.constant 0 : index
    %30 = vector.load %arg6[%c0_13, %c0_14, %c0_15, %c0_16] : memref<1x9x8x128xf32, #tpu.memory_space<vmem>>, vector<1x1x8x128xf32>
    %31 = vector.shape_cast %30 : vector<1x1x8x128xf32> to vector<8x128xf32>
    %32 = vector.shape_cast %31 : vector<8x128xf32> to vector<1x8x128xf32>
    %33 = vector.broadcast %32 : vector<1x8x128xf32> to vector<4x8x128xf32>
    %34 = arith.mulf %29, %33 : vector<4x8x128xf32>
    %c0_17 = arith.constant 0 : index
    %c1 = arith.constant 1 : index
    %c0_18 = arith.constant 0 : index
    %c0_19 = arith.constant 0 : index
    %35 = vector.load %arg6[%c0_17, %c1, %c0_18, %c0_19] : memref<1x9x8x128xf32, #tpu.memory_space<vmem>>, vector<1x1x8x128xf32>
    %36 = vector.shape_cast %35 : vector<1x1x8x128xf32> to vector<8x128xf32>
    %37 = vector.shape_cast %36 : vector<8x128xf32> to vector<1x8x128xf32>
    %38 = vector.broadcast %37 : vector<1x8x128xf32> to vector<4x8x128xf32>
    %39 = arith.mulf %26, %38 : vector<4x8x128xf32>
    %40 = arith.addf %34, %39 : vector<4x8x128xf32>
    %41 = vector.extract_strided_slice %26 {offsets = [0, 0, 1], sizes = [4, 8, 127], strides = [1, 1, 1]} : vector<4x8x128xf32> to vector<4x8x127xf32>
    %42 = vector.extract_strided_slice %26 {offsets = [0, 0, 0], sizes = [4, 8, 1], strides = [1, 1, 1]} : vector<4x8x128xf32> to vector<4x8x1xf32>
    %43 = tpu.concatenate %41, %42 in 2 : vector<4x8x127xf32>, vector<4x8x1xf32> -> vector<4x8x128xf32>
    %c0_20 = arith.constant 0 : index
    %c2 = arith.constant 2 : index
    %c0_21 = arith.constant 0 : index
    %c0_22 = arith.constant 0 : index
    %44 = vector.load %arg6[%c0_20, %c2, %c0_21, %c0_22] : memref<1x9x8x128xf32, #tpu.memory_space<vmem>>, vector<1x1x8x128xf32>
    %45 = vector.shape_cast %44 : vector<1x1x8x128xf32> to vector<8x128xf32>
    %46 = vector.shape_cast %45 : vector<8x128xf32> to vector<1x8x128xf32>
    %47 = vector.broadcast %46 : vector<1x8x128xf32> to vector<4x8x128xf32>
    %48 = arith.mulf %43, %47 : vector<4x8x128xf32>
    %49 = arith.addf %40, %48 : vector<4x8x128xf32>
    %50 = vector.extract_strided_slice %25 {offsets = [0, 8, 0], sizes = [4, 8, 128], strides = [1, 1, 1]} : vector<4x24x128xf32> to vector<4x8x128xf32>
    %51 = vector.extract_strided_slice %50 {offsets = [0, 0, 127], sizes = [4, 8, 1], strides = [1, 1, 1]} : vector<4x8x128xf32> to vector<4x8x1xf32>
    %52 = vector.extract_strided_slice %50 {offsets = [0, 0, 0], sizes = [4, 8, 127], strides = [1, 1, 1]} : vector<4x8x128xf32> to vector<4x8x127xf32>
    %53 = tpu.concatenate %51, %52 in 2 : vector<4x8x1xf32>, vector<4x8x127xf32> -> vector<4x8x128xf32>
    %c0_23 = arith.constant 0 : index
    %c3 = arith.constant 3 : index
    %c0_24 = arith.constant 0 : index
    %c0_25 = arith.constant 0 : index
    %54 = vector.load %arg6[%c0_23, %c3, %c0_24, %c0_25] : memref<1x9x8x128xf32, #tpu.memory_space<vmem>>, vector<1x1x8x128xf32>
    %55 = vector.shape_cast %54 : vector<1x1x8x128xf32> to vector<8x128xf32>
    %56 = vector.shape_cast %55 : vector<8x128xf32> to vector<1x8x128xf32>
    %57 = vector.broadcast %56 : vector<1x8x128xf32> to vector<4x8x128xf32>
    %58 = arith.mulf %53, %57 : vector<4x8x128xf32>
    %59 = arith.addf %49, %58 : vector<4x8x128xf32>
    %c0_26 = arith.constant 0 : index
    %c4 = arith.constant 4 : index
    %c0_27 = arith.constant 0 : index
    %c0_28 = arith.constant 0 : index
    %60 = vector.load %arg6[%c0_26, %c4, %c0_27, %c0_28] : memref<1x9x8x128xf32, #tpu.memory_space<vmem>>, vector<1x1x8x128xf32>
    %61 = vector.shape_cast %60 : vector<1x1x8x128xf32> to vector<8x128xf32>
    %62 = vector.shape_cast %61 : vector<8x128xf32> to vector<1x8x128xf32>
    %63 = vector.broadcast %62 : vector<1x8x128xf32> to vector<4x8x128xf32>
    %64 = arith.mulf %50, %63 : vector<4x8x128xf32>
    %65 = arith.addf %59, %64 : vector<4x8x128xf32>
    %66 = vector.extract_strided_slice %50 {offsets = [0, 0, 1], sizes = [4, 8, 127], strides = [1, 1, 1]} : vector<4x8x128xf32> to vector<4x8x127xf32>
    %67 = vector.extract_strided_slice %50 {offsets = [0, 0, 0], sizes = [4, 8, 1], strides = [1, 1, 1]} : vector<4x8x128xf32> to vector<4x8x1xf32>
    %68 = tpu.concatenate %66, %67 in 2 : vector<4x8x127xf32>, vector<4x8x1xf32> -> vector<4x8x128xf32>
    %c0_29 = arith.constant 0 : index
    %c5 = arith.constant 5 : index
    %c0_30 = arith.constant 0 : index
    %c0_31 = arith.constant 0 : index
    %69 = vector.load %arg6[%c0_29, %c5, %c0_30, %c0_31] : memref<1x9x8x128xf32, #tpu.memory_space<vmem>>, vector<1x1x8x128xf32>
    %70 = vector.shape_cast %69 : vector<1x1x8x128xf32> to vector<8x128xf32>
    %71 = vector.shape_cast %70 : vector<8x128xf32> to vector<1x8x128xf32>
    %72 = vector.broadcast %71 : vector<1x8x128xf32> to vector<4x8x128xf32>
    %73 = arith.mulf %68, %72 : vector<4x8x128xf32>
    %74 = arith.addf %65, %73 : vector<4x8x128xf32>
    %75 = vector.extract_strided_slice %25 {offsets = [0, 9, 0], sizes = [4, 8, 128], strides = [1, 1, 1]} : vector<4x24x128xf32> to vector<4x8x128xf32>
    %76 = vector.extract_strided_slice %75 {offsets = [0, 0, 127], sizes = [4, 8, 1], strides = [1, 1, 1]} : vector<4x8x128xf32> to vector<4x8x1xf32>
    %77 = vector.extract_strided_slice %75 {offsets = [0, 0, 0], sizes = [4, 8, 127], strides = [1, 1, 1]} : vector<4x8x128xf32> to vector<4x8x127xf32>
    %78 = tpu.concatenate %76, %77 in 2 : vector<4x8x1xf32>, vector<4x8x127xf32> -> vector<4x8x128xf32>
    %c0_32 = arith.constant 0 : index
    %c6 = arith.constant 6 : index
    %c0_33 = arith.constant 0 : index
    %c0_34 = arith.constant 0 : index
    %79 = vector.load %arg6[%c0_32, %c6, %c0_33, %c0_34] : memref<1x9x8x128xf32, #tpu.memory_space<vmem>>, vector<1x1x8x128xf32>
    %80 = vector.shape_cast %79 : vector<1x1x8x128xf32> to vector<8x128xf32>
    %81 = vector.shape_cast %80 : vector<8x128xf32> to vector<1x8x128xf32>
    %82 = vector.broadcast %81 : vector<1x8x128xf32> to vector<4x8x128xf32>
    %83 = arith.mulf %78, %82 : vector<4x8x128xf32>
    %84 = arith.addf %74, %83 : vector<4x8x128xf32>
    %c0_35 = arith.constant 0 : index
    %c7 = arith.constant 7 : index
    %c0_36 = arith.constant 0 : index
    %c0_37 = arith.constant 0 : index
    %85 = vector.load %arg6[%c0_35, %c7, %c0_36, %c0_37] : memref<1x9x8x128xf32, #tpu.memory_space<vmem>>, vector<1x1x8x128xf32>
    %86 = vector.shape_cast %85 : vector<1x1x8x128xf32> to vector<8x128xf32>
    %87 = vector.shape_cast %86 : vector<8x128xf32> to vector<1x8x128xf32>
    %88 = vector.broadcast %87 : vector<1x8x128xf32> to vector<4x8x128xf32>
    %89 = arith.mulf %75, %88 : vector<4x8x128xf32>
    %90 = arith.addf %84, %89 : vector<4x8x128xf32>
    %91 = vector.extract_strided_slice %75 {offsets = [0, 0, 1], sizes = [4, 8, 127], strides = [1, 1, 1]} : vector<4x8x128xf32> to vector<4x8x127xf32>
    %92 = vector.extract_strided_slice %75 {offsets = [0, 0, 0], sizes = [4, 8, 1], strides = [1, 1, 1]} : vector<4x8x128xf32> to vector<4x8x1xf32>
    %93 = tpu.concatenate %91, %92 in 2 : vector<4x8x127xf32>, vector<4x8x1xf32> -> vector<4x8x128xf32>
    %c0_38 = arith.constant 0 : index
    %c8 = arith.constant 8 : index
    %c0_39 = arith.constant 0 : index
    %c0_40 = arith.constant 0 : index
    %94 = vector.load %arg6[%c0_38, %c8, %c0_39, %c0_40] : memref<1x9x8x128xf32, #tpu.memory_space<vmem>>, vector<1x1x8x128xf32>
    %95 = vector.shape_cast %94 : vector<1x1x8x128xf32> to vector<8x128xf32>
    %96 = vector.shape_cast %95 : vector<8x128xf32> to vector<1x8x128xf32>
    %97 = vector.broadcast %96 : vector<1x8x128xf32> to vector<4x8x128xf32>
    %98 = arith.mulf %93, %97 : vector<4x8x128xf32>
    %99 = arith.addf %90, %98 : vector<4x8x128xf32>
    %c0_41 = arith.constant 0 : index
    %c0_42 = arith.constant 0 : index
    %c0_43 = arith.constant 0 : index
    %c0_44 = arith.constant 0 : index
    %100 = vector.load %arg7[%c0_41, %c0_42, %c0_43, %c0_44] : memref<1x4x8x128xf32, #tpu.memory_space<vmem>>, vector<1x4x8x128xf32>
    %101 = vector.shape_cast %100 : vector<1x4x8x128xf32> to vector<4x8x128xf32>
    %102 = vector.shape_cast %99 : vector<4x8x128xf32> to vector<1x4x8x128xf32>
    tpu.vector_store %arg7[%c0_41, %c0_42, %c0_43, %c0_44], %102 {strides = array<i32>} : memref<1x4x8x128xf32, #tpu.memory_space<vmem>>, vector<1x4x8x128xf32>,
    return
  }
  func.func @transform_0(%arg0: i32, %arg1: i32, %arg2: i32) -> (i32, i32, i32, i32) {
    %c0_i32 = arith.constant 0 : i32
    %c0_i32_0 = arith.constant 0 : i32
    return %arg0, %arg2, %arg1, %c0_i32 : i32, i32, i32, i32
  }
  func.func @transform_1(%arg0: i32, %arg1: i32, %arg2: i32) -> (i32, i32, i32, i32) {
    %c1_i32 = arith.constant 1 : i32
    %0 = arith.muli %arg1, %c1_i32 : i32
    %c1_i32_0 = arith.constant 1 : i32
    %1 = arith.subi %0, %c1_i32_0 : i32
    %c0_i32 = arith.constant 0 : i32
    %2 = arith.maxsi %1, %c0_i32 : i32
    %c0_i32_1 = arith.constant 0 : i32
    %c0_i32_2 = arith.constant 0 : i32
    return %arg0, %arg2, %2, %c0_i32_1 : i32, i32, i32, i32
  }
  func.func @transform_2(%arg0: i32, %arg1: i32, %arg2: i32) -> (i32, i32, i32, i32) {
    %c1_i32 = arith.constant 1 : i32
    %0 = arith.addi %arg1, %c1_i32 : i32
    %c1_i32_0 = arith.constant 1 : i32
    %1 = arith.muli %0, %c1_i32_0 : i32
    %c1_i32_1 = arith.constant 1 : i32
    %2 = arith.minsi %1, %c1_i32_1 : i32
    %c0_i32 = arith.constant 0 : i32
    %c0_i32_2 = arith.constant 0 : i32
    return %arg0, %arg2, %2, %c0_i32 : i32, i32, i32, i32
  }
  func.func @transform_3(%arg0: i32, %arg1: i32, %arg2: i32) -> (i32, i32, i32, i32) {
    %c0_i32 = arith.constant 0 : i32
    %c0_i32_0 = arith.constant 0 : i32
    %c0_i32_1 = arith.constant 0 : i32
    return %arg0, %c0_i32, %arg1, %c0_i32_0 : i32, i32, i32, i32
  }
  func.func @transform_4(%arg0: i32, %arg1: i32, %arg2: i32) -> (i32, i32, i32, i32) {
    %c0_i32 = arith.constant 0 : i32
    %c0_i32_0 = arith.constant 0 : i32
    return %arg0, %arg2, %arg1, %c0_i32 : i32, i32, i32, i32
  }
}

</mosaic_0001>

<llo_original>
// kernel: tpu_custom_call.1
$region0: #{tpu_custom_call.1}
  #allocation0 [shape = 'u32[]', space=smem, size = 0x4, offset = 0x4, fixed_abs, tag = 'smem constant byte address 0x4 - core index']
  #allocation1 [shape = 'u32[72,128]{1,0:T(1,128)}', space=vmem, size = 0x9000, scoped, tag = 'internal scratch']
  %s0 = inlined_call_operand.hbm [shape: f32[2,4,16,16], index: 0, kind: input, shape index: {}]
  %s1 = inlined_call_operand.hbm [shape: f32[2,4,16,16], index: 1, kind: input, shape index: {}]
  %s2 = inlined_call_operand.hbm [shape: f32[2,4,16,16], index: 2, kind: input, shape index: {}]
  %s3 = inlined_call_operand.hbm [shape: f32[2,9,16,16], index: 3, kind: input, shape index: {}]
  %s4 = inlined_call_operand.hbm [shape: f32[2,4,16,16], index: 4, kind: output, shape index: {}]
  %s5 = sld [smem:[#allocation0]]
  $region65: #{tpu_custom_call.1} parent=0
    _
  %s7 = ssub.s32 1, %s5
  %s8 = scalar_select 0, %s7, %s5
  $region1: #{tpu_custom_call.1} parent=0
    #allocation2 [shape = 'u8[32768]{0}', space=vmem, size = 0x8000, scoped, tag = 'input window, operand 0']
    #allocation3 [shape = 's32[2]{0}', space=sflag, size = 0x8, scoped, tag = 'scoped memory for tpu_custom_call.1']
    #allocation4 [shape = 's32[2]{0}', space=sflag, size = 0x8, scoped, tag = 'scoped memory for tpu_custom_call.1']
    #allocation5 [shape = 'u8[32768]{0}', space=vmem, size = 0x8000, scoped, tag = 'input window, operand 1']
    #allocation6 [shape = 's32[2]{0}', space=sflag, size = 0x8, scoped, tag = 'scoped memory for tpu_custom_call.1']
    #allocation7 [shape = 'u8[32768]{0}', space=vmem, size = 0x8000, scoped, tag = 'input window, operand 2']
    #allocation8 [shape = 'u8[73728]{0}', space=vmem, size = 0x12000, scoped, tag = 'input window, operand 3']
    #allocation9 [shape = 's32[2]{0}', space=sflag, size = 0x8, scoped, tag = 'scoped memory for tpu_custom_call.1']
    #allocation10 [shape = 'u8[32768]{0}', space=vmem, size = 0x8000, scoped, tag = 'output window, operand 0']
    %9 = vsyncpa [#allocation3], 0
    %s10 = scalar_lea.sflag [#allocation3], 1
    %11 = vsyncpa %s10, 0
    %12 = vsyncpa [#allocation6], 0
    %s13 = scalar_lea.sflag [#allocation6], 1
    %14 = vsyncpa %s13, 0
    %15 = vsyncpa [#allocation9], 0
    %s16 = scalar_lea.sflag [#allocation9], 1
    %17 = vsyncpa %s16, 0
    %18 = vsyncpa [#allocation4], 0
    %s19 = scalar_lea.sflag [#allocation4], 1
    %20 = vsyncpa %s19, 0
    loop: start=0, step=1, limit=6
    $region2: #{tpu_custom_call.1} parent=1 // loop_pre_header
      _
    $region3: #{tpu_custom_call.1} parent=1 // loop_header
      %s22 = sphi 0, %s26
      %p23 = scmp.ge.s32.totalorder %s22, 6
      %s29 = sphi 0, %s48
      %s30 = sphi 0, %s44
      %s31 = sphi 0, %s40
      %s32 = sphi 0, %s29
      %s33 = sphi 0, %s30
      %s34 = sphi 0, %s31
      %s35 = sphi 0, %s32
      %s36 = sphi 0, %s33
      %s37 = sphi 0, %s34
      %s55 = sphi 0, %s57
      %s58 = sphi 0, %s55
      %s59 = sphi 0, %s58
      %s75 = sphi 0, %s59
      %s91 = sphi 0, %s93
      %s94 = sphi 0, %s91
      %s95 = sphi 0, %s94
      %s111 = sphi 0, %s95
      %s127 = sphi 0, %s129
      %s130 = sphi 0, %s127
      %s131 = sphi 0, %s130
      %s147 = sphi 0, %s131
      %s155 = sphi 0, %s157
      %s158 = sphi 0, %s155
      %s159 = sphi 0, %s158
      %s175 = sphi 0, %s159
      %s185 = sphi 0, %s187
      %s188 = sphi 0, %s185
      %s189 = sphi 0, %s188
      %s205 = sphi 0, %s189
    $region4: #{tpu_custom_call.1} parent=1 // loop_header_branch
      %25 = sbr.rel (%p23) target = $region8
    $region5: #{tpu_custom_call.1} parent=1 // loop_body
      %s27 = ssub.s32 %s22, 1
      %s28 = ssub.s32 %s22, 2
      %s38 = sadd.s32 1, %s31
      %p39 = scmp.ge.s32.totalorder %s38, 1
      %s40 = scalar_select %p39, 0, %s38
      %s41 = sadd.s32 1, %s30
      %s42 = scalar_select %p39, %s41, %s30
      %p43 = scmp.ge.s32.totalorder %s42, 2
      %s44 = scalar_select %p43, 0, %s42
      %s45 = sadd.s32 1, %s29
      %s46 = scalar_select %p43, %s45, %s29
      %p47 = scmp.ge.s32.totalorder %s46, 2
      %s48 = scalar_select %p47, 0, %s46
      %s49 = ssub.s32 %s29, %s48
      %s50 = ssub.s32 %s31, %s40
      %s51 = sor.u32 %s49, %s50
      %s52 = ssub.s32 %s30, %s44
      %s53 = sor.u32 %s51, %s52
      %p54 = scmp.eq.s32.totalorder %s53, 0
      %s56 = sadd.s32 %s55, 1
      %s57 = scalar_select %p54, %s55, %s56
      %p60 = pneg %p54
      %p61 = scmp.eq.s32.totalorder %s22, 3
      %p62 = por %p60, %p61
      %p63 = scmp.ne.s32.totalorder %s55, %s58
      %p64 = scmp.eq.s32.totalorder %s22, 0
      %p65 = por %p63, %p64
      %p66 = scmp.ne.s32.totalorder %s55, %s58
      %p67 = scmp.eq.s32.totalorder %s27, 3
      %p68 = por %p66, %p67
      %p69 = scmp.ne.s32.totalorder %s58, %s59
      %p70 = scmp.eq.s32.totalorder %s27, 0
      %p71 = por %p69, %p70
      %p72 = scmp.ne.s32.totalorder %s58, %s59
      %p73 = scmp.eq.s32.totalorder %s28, 3
      %p74 = por %p72, %p73
      %p76 = scmp.ne.s32.totalorder %s59, %s75
      %p77 = scmp.eq.s32.totalorder %s28, 0
      %p78 = por %p76, %p77
      %s79 = ssub.s32 %s30, 1
      %p80 = scmp.gt.s32.totalorder %s79, 0
      %s81 = scalar_select %p80, %s79, 0
      %s82 = ssub.s32 %s44, 1
      %p83 = scmp.gt.s32.totalorder %s82, 0
      %s84 = scalar_select %p83, %s82, 0
      %s85 = ssub.s32 %s29, %s48
      %s86 = ssub.s32 %s31, %s40
      %s87 = sor.u32 %s85, %s86
      %s88 = ssub.s32 %s81, %s84
      %s89 = sor.u32 %s87, %s88
      %p90 = scmp.eq.s32.totalorder %s89, 0
      %s92 = sadd.s32 %s91, 1
      %s93 = scalar_select %p90, %s91, %s92
      %p96 = pneg %p90
      %p97 = scmp.eq.s32.totalorder %s22, 3
      %p98 = por %p96, %p97
      %p99 = scmp.ne.s32.totalorder %s91, %s94
      %p100 = scmp.eq.s32.totalorder %s22, 0
      %p101 = por %p99, %p100
      %p102 = scmp.ne.s32.totalorder %s91, %s94
      %p103 = scmp.eq.s32.totalorder %s27, 3
      %p104 = por %p102, %p103
      %p105 = scmp.ne.s32.totalorder %s94, %s95
      %p106 = scmp.eq.s32.totalorder %s27, 0
      %p107 = por %p105, %p106
      %p108 = scmp.ne.s32.totalorder %s94, %s95
      %p109 = scmp.eq.s32.totalorder %s28, 3
      %p110 = por %p108, %p109
      %p112 = scmp.ne.s32.totalorder %s95, %s111
      %p113 = scmp.eq.s32.totalorder %s28, 0
      %p114 = por %p112, %p113
      %s115 = sadd.s32 %s30, 1
      %p116 = scmp.lt.s32.totalorder %s115, 1
      %s117 = scalar_select %p116, %s115, 1
      %s118 = sadd.s32 %s44, 1
      %p119 = scmp.lt.s32.totalorder %s118, 1
      %s120 = scalar_select %p119, %s118, 1
      %s121 = ssub.s32 %s29, %s48
      %s122 = ssub.s32 %s31, %s40
      %s123 = sor.u32 %s121, %s122
      %s124 = ssub.s32 %s117, %s120
      %s125 = sor.u32 %s123, %s124
      %p126 = scmp.eq.s32.totalorder %s125, 0
      %s128 = sadd.s32 %s127, 1
      %s129 = scalar_select %p126, %s127, %s128
      %p132 = pneg %p126
      %p133 = scmp.eq.s32.totalorder %s22, 3
      %p134 = por %p132, %p133
      %p135 = scmp.ne.s32.totalorder %s127, %s130
      %p136 = scmp.eq.s32.totalorder %s22, 0
      %p137 = por %p135, %p136
      %p138 = scmp.ne.s32.totalorder %s127, %s130
      %p139 = scmp.eq.s32.totalorder %s27, 3
      %p140 = por %p138, %p139
      %p141 = scmp.ne.s32.totalorder %s130, %s131
      %p142 = scmp.eq.s32.totalorder %s27, 0
      %p143 = por %p141, %p142
      %p144 = scmp.ne.s32.totalorder %s130, %s131
      %p145 = scmp.eq.s32.totalorder %s28, 3
      %p146 = por %p144, %p145
      %p148 = scmp.ne.s32.totalorder %s131, %s147
      %p149 = scmp.eq.s32.totalorder %s28, 0
      %p150 = por %p148, %p149
      %s151 = ssub.s32 %s29, %s48
      %s152 = ssub.s32 %s30, %s44
      %s153 = sor.u32 %s151, %s152
      %p154 = scmp.eq.s32.totalorder %s153, 0
      %s156 = sadd.s32 %s155, 1
      %s157 = scalar_select %p154, %s155, %s156
      %p160 = pneg %p154
      %p161 = scmp.eq.s32.totalorder %s22, 3
      %p162 = por %p160, %p161
      %p163 = scmp.ne.s32.totalorder %s155, %s158
      %p164 = scmp.eq.s32.totalorder %s22, 0
      %p165 = por %p163, %p164
      %p166 = scmp.ne.s32.totalorder %s155, %s158
      %p167 = scmp.eq.s32.totalorder %s27, 3
      %p168 = por %p166, %p167
      %p169 = scmp.ne.s32.totalorder %s158, %s159
      %p170 = scmp.eq.s32.totalorder %s27, 0
      %p171 = por %p169, %p170
      %p172 = scmp.ne.s32.totalorder %s158, %s159
      %p173 = scmp.eq.s32.totalorder %s28, 3
      %p174 = por %p172, %p173
      %p176 = scmp.ne.s32.totalorder %s159, %s175
      %p177 = scmp.eq.s32.totalorder %s28, 0
      %p178 = por %p176, %p177
      %s179 = ssub.s32 %s29, %s48
      %s180 = ssub.s32 %s31, %s40
      %s181 = sor.u32 %s179, %s180
      %s182 = ssub.s32 %s30, %s44
      %s183 = sor.u32 %s181, %s182
      %p184 = scmp.eq.s32.totalorder %s183, 0
      %s186 = sadd.s32 %s185, 1
      %s187 = scalar_select %p184, %s185, %s186
      %p190 = pneg %p184
      %p191 = scmp.eq.s32.totalorder %s22, 3
      %p192 = por %p190, %p191
      %p193 = scmp.ne.s32.totalorder %s185, %s188
      %p194 = scmp.eq.s32.totalorder %s22, 0
      %p195 = por %p193, %p194
      %p196 = scmp.ne.s32.totalorder %s185, %s188
      %p197 = scmp.eq.s32.totalorder %s27, 3
      %p198 = por %p196, %p197
      %p199 = scmp.ne.s32.totalorder %s188, %s189
      %p200 = scmp.eq.s32.totalorder %s27, 0
      %p201 = por %p199, %p200
      %p202 = scmp.ne.s32.totalorder %s188, %s189
      %p203 = scmp.eq.s32.totalorder %s28, 3
      %p204 = por %p202, %p203
      %p206 = scmp.ne.s32.totalorder %s189, %s205
      %p207 = scmp.eq.s32.totalorder %s28, 0
      %p208 = por %p206, %p207
      %p209 = scmp.le.s32.totalorder 1, %s22
      %p210 = scmp.lt.s32.totalorder %s22, 5
      %p211 = pnand %p209, %p210
      %p212 = pneg %p211
      // Predicated region
      $region9: #{tpu_custom_call.1} parent=5 // pred_check
        _
      $region10: #{tpu_custom_call.1} parent=5 // pred_check_branch
        %214 = sbr.rel (%p211) target = $region12
      $region11: #{tpu_custom_call.1} parent=5 // pred_region
        %s215 = ssub.s32 %s22, 1
      $region12: #{tpu_custom_call.1} parent=5 // pred_fallthru
        _
      %p216 = scmp.lt.s32.totalorder %s22, 4
      // Predicated region
      $region13: #{tpu_custom_call.1} parent=5 // pred_check
        %p217 = pneg %p216
      $region14: #{tpu_custom_call.1} parent=5 // pred_check_branch
        %219 = sbr.rel (%p217) target = $region16
      $region15: #{tpu_custom_call.1} parent=5 // pred_region
        // Predicated region
        $region17: #{tpu_custom_call.1} parent=15 // pred_check
          %p220 = pneg %p65
        $region18: #{tpu_custom_call.1} parent=15 // pred_check_branch
          %222 = sbr.rel (%p220) target = $region20
        $region19: #{tpu_custom_call.1} parent=15 // pred_region
          %s223 = sand.u32 %s55, 1
          %s224 = scalar_lea.sflag [#allocation3], %s223
          %s225 = sand.u32 %s55, 1
          %s226 = smul.addr %s225, 32
          %s227 = scalar_lea.vmem [#allocation2], %s226
          %s228 = smul.u32 4, %s31
          %230 = vsyncadd %s224, 0
          %s231 = smul.addr %s228, 2
          %s232 = sadd.s32 %s30, %s231
          %s233 = smul.addr %s29, 8
          %s234 = sadd.s32 %s232, %s233
          %s235 = smul.addr %s234, 8
          %s236 = scalar_lea.hbm %s0, %s235
          %s237 = sshll.u32 %s236, 4
          %s238 = int_to_ptr.hbm [resolvable:$true] %s237
          %s239 = sshll.u32 %s227, 4
          %s240 = int_to_ptr.vmem [resolvable:$true] %s239
          %245 = dma.hbm_to_vmem [thread:$0]  %s238, 512, %s240, %s224, 256, 128, 8
        $region20: #{tpu_custom_call.1} parent=15 // pred_fallthru
          _
        // Predicated region
        $region21: #{tpu_custom_call.1} parent=15 // pred_check
          %p246 = pneg %p101
        $region22: #{tpu_custom_call.1} parent=15 // pred_check_branch
          %248 = sbr.rel (%p246) target = $region24
        $region23: #{tpu_custom_call.1} parent=15 // pred_region
          %s249 = sand.u32 %s22, 1
          %s250 = scalar_lea.sflag [#allocation6], %s249
          %s251 = sand.u32 %s91, 1
          %s252 = smul.addr %s251, 32
          %s253 = scalar_lea.vmem [#allocation5], %s252
          %s254 = ssub.s32 %s30, 1
          %p255 = scmp.gt.s32.totalorder %s254, 0
          %s256 = scalar_select %p255, %s254, 0
          %s257 = smul.u32 4, %s31
          %259 = vsyncadd %s250, 0
          %s260 = smul.addr %s257, 2
          %s261 = sadd.s32 %s256, %s260
          %s262 = smul.addr %s29, 8
          %s263 = sadd.s32 %s261, %s262
          %s264 = smul.addr %s263, 8
          %s265 = scalar_lea.hbm %s1, %s264
          %s266 = sshll.u32 %s265, 4
          %s267 = int_to_ptr.hbm [resolvable:$true] %s266
          %s268 = sshll.u32 %s253, 4
          %s269 = int_to_ptr.vmem [resolvable:$true] %s268
          %274 = dma.hbm_to_vmem [thread:$0]  %s267, 512, %s269, %s250, 256, 128, 8
        $region24: #{tpu_custom_call.1} parent=15 // pred_fallthru
          _
        // Predicated region
        $region25: #{tpu_custom_call.1} parent=15 // pred_check
          %p275 = pneg %p137
        $region26: #{tpu_custom_call.1} parent=15 // pred_check_branch
          %277 = sbr.rel (%p275) target = $region28
        $region27: #{tpu_custom_call.1} parent=15 // pred_region
          %s278 = sand.u32 %s22, 1
          %s279 = scalar_lea.sflag [#allocation6], %s278
          %s280 = sand.u32 %s127, 1
          %s281 = smul.addr %s280, 32
          %s282 = scalar_lea.vmem [#allocation7], %s281
          %s283 = sadd.s32 %s30, 1
          %p284 = scmp.lt.s32.totalorder %s283, 1
          %s285 = scalar_select %p284, %s283, 1
          %s286 = smul.u32 4, %s31
          %288 = vsyncadd %s279, 0
          %s289 = smul.addr %s286, 2
          %s290 = sadd.s32 %s285, %s289
          %s291 = smul.addr %s29, 8
          %s292 = sadd.s32 %s290, %s291
          %s293 = smul.addr %s292, 8
          %s294 = scalar_lea.hbm %s2, %s293
          %s295 = sshll.u32 %s294, 4
          %s296 = int_to_ptr.hbm [resolvable:$true] %s295
          %s297 = sshll.u32 %s282, 4
          %s298 = int_to_ptr.vmem [resolvable:$true] %s297
          %303 = dma.hbm_to_vmem [thread:$0]  %s296, 512, %s298, %s279, 256, 128, 8
        $region28: #{tpu_custom_call.1} parent=15 // pred_fallthru
          _
        // Predicated region
        $region29: #{tpu_custom_call.1} parent=15 // pred_check
          %p304 = pneg %p165
        $region30: #{tpu_custom_call.1} parent=15 // pred_check_branch
          %306 = sbr.rel (%p304) target = $region32
        $region31: #{tpu_custom_call.1} parent=15 // pred_region
          %s307 = sand.u32 %s155, 1
          %s308 = scalar_lea.sflag [#allocation9], %s307
          %s309 = sand.u32 %s155, 1
          %s310 = smul.addr %s309, 72
          %s311 = scalar_lea.vmem [#allocation8], %s310
          %313 = vsyncadd %s308, 0
          %s314 = smul.addr %s29, 18
          %s315 = sadd.s32 %s30, %s314
          %s316 = smul.addr %s315, 8
          %s317 = scalar_lea.hbm %s3, %s316
          %s318 = sshll.u32 %s317, 4
          %s319 = int_to_ptr.hbm [resolvable:$true] %s318
          %s320 = sshll.u32 %s311, 4
          %s321 = int_to_ptr.vmem [resolvable:$true] %s320
          %326 = dma.hbm_to_vmem [thread:$0]  %s319, 1152, %s321, %s308, 256, 128, 8
        $region32: #{tpu_custom_call.1} parent=15 // pred_fallthru
          _
      $region16: #{tpu_custom_call.1} parent=5 // pred_fallthru
        _
      %p327 = scmp.le.s32.totalorder 1, %s22
      %p328 = scmp.lt.s32.totalorder %s22, 5
      %p329 = pnand %p327, %p328
      %p330 = pneg %p329
      // Predicated region
      $region33: #{tpu_custom_call.1} parent=5 // pred_check
        _
      $region34: #{tpu_custom_call.1} parent=5 // pred_check_branch
        %332 = sbr.rel (%p329) target = $region36
      $region35: #{tpu_custom_call.1} parent=5 // pred_region
        %s333 = ssub.s32 %s22, 1
        %s334 = sand.u32 %s58, 1
        %s335 = scalar_lea.sflag [#allocation3], %s334
        %s336 = sand.u32 %s58, 1
        %s337 = smul.addr %s336, 32
        %s338 = scalar_lea.vmem [#allocation2], %s337
        // Predicated region
        $region37: #{tpu_custom_call.1} parent=35 // pred_check
          %p339 = pneg %p71
        $region38: #{tpu_custom_call.1} parent=35 // pred_check_branch
          %341 = sbr.rel (%p339) target = $region40
        $region39: #{tpu_custom_call.1} parent=35 // pred_region
          %343 = dma.done %s335, 512
        $region40: #{tpu_custom_call.1} parent=35 // pred_fallthru
          _
        %s344 = sand.u32 %s27, 1
        %s345 = scalar_lea.sflag [#allocation6], %s344
        %s346 = sand.u32 %s94, 1
        %s347 = smul.addr %s346, 32
        %s348 = scalar_lea.vmem [#allocation5], %s347
        // Predicated region
        $region41: #{tpu_custom_call.1} parent=35 // pred_check
          %p349 = pneg %p107
        $region42: #{tpu_custom_call.1} parent=35 // pred_check_branch
          %351 = sbr.rel (%p349) target = $region44
        $region43: #{tpu_custom_call.1} parent=35 // pred_region
          %353 = dma.done %s345, 512
        $region44: #{tpu_custom_call.1} parent=35 // pred_fallthru
          _
        %s354 = sand.u32 %s27, 1
        %s355 = scalar_lea.sflag [#allocation6], %s354
        %s356 = sand.u32 %s130, 1
        %s357 = smul.addr %s356, 32
        %s358 = scalar_lea.vmem [#allocation7], %s357
        // Predicated region
        $region45: #{tpu_custom_call.1} parent=35 // pred_check
          %p359 = pneg %p143
        $region46: #{tpu_custom_call.1} parent=35 // pred_check_branch
          %361 = sbr.rel (%p359) target = $region48
        $region47: #{tpu_custom_call.1} parent=35 // pred_region
          %363 = dma.done %s355, 512
        $region48: #{tpu_custom_call.1} parent=35 // pred_fallthru
          _
        %s364 = sand.u32 %s158, 1
        %s365 = scalar_lea.sflag [#allocation9], %s364
        %s366 = sand.u32 %s158, 1
        %s367 = smul.addr %s366, 72
        %s368 = scalar_lea.vmem [#allocation8], %s367
        // Predicated region
        $region49: #{tpu_custom_call.1} parent=35 // pred_check
          %p369 = pneg %p171
        $region50: #{tpu_custom_call.1} parent=35 // pred_check_branch
          %371 = sbr.rel (%p369) target = $region52
        $region51: #{tpu_custom_call.1} parent=35 // pred_region
          %373 = dma.done %s365, 1152
        $region52: #{tpu_custom_call.1} parent=35 // pred_fallthru
          _
        %s374 = sand.u32 %s58, 1
        %s375 = scalar_lea.sflag [#allocation3], %s374
        %s376 = sand.u32 %s58, 1
        %s377 = smul.addr %s376, 32
        %s378 = scalar_lea.vmem [#allocation2], %s377
        %p379 = pneg %p71
        %p380 = pneg %p68
        %s381 = sand.u32 %s27, 1
        %s382 = scalar_lea.sflag [#allocation6], %s381
        %s383 = sand.u32 %s94, 1
        %s384 = smul.addr %s383, 32
        %s385 = scalar_lea.vmem [#allocation5], %s384
        %p386 = pneg %p107
        %p387 = pneg %p104
        %s388 = sand.u32 %s27, 1
        %s389 = scalar_lea.sflag [#allocation6], %s388
        %s390 = sand.u32 %s130, 1
        %s391 = smul.addr %s390, 32
        %s392 = scalar_lea.vmem [#allocation7], %s391
        %p393 = pneg %p143
        %p394 = pneg %p140
        %s395 = sand.u32 %s158, 1
        %s396 = scalar_lea.sflag [#allocation9], %s395
        %s397 = sand.u32 %s158, 1
        %s398 = smul.addr %s397, 72
        %s399 = scalar_lea.vmem [#allocation8], %s398
        %p400 = pneg %p171
        %p401 = pneg %p168
        %p402 = pneg %p201
        %p403 = pneg %p198
        %s404 = sand.u32 %s188, 1
        %s405 = scalar_lea.sflag [#allocation4], %s404
        %s406 = sand.u32 %s188, 1
        %s407 = smul.addr %s406, 32
        %s408 = scalar_lea.vmem [#allocation10], %s407
        %s409 = smul.u32 4, %s34
        %s410 = ssub.s32 %s33, 1
        %p411 = scmp.gt.s32.totalorder %s410, 0
        %s412 = scalar_select %p411, %s410, 0
        %s413 = smul.u32 4, %s34
        %s414 = sadd.s32 %s33, 1
        %p415 = scmp.lt.s32.totalorder %s414, 1
        %s416 = scalar_select %p415, %s414, 1
        %s417 = smul.u32 4, %s34
        %s418 = smul.u32 4, %s34
        %v419 = vld [vmem:[%s348] sm:$0xff]
        %v420 = vld [vmem:[%s348 + $0x8] sm:$0xff]
        %v421 = vld [vmem:[%s348 + $0x10] sm:$0xff]
        %v422 = vld [vmem:[%s348 + $0x18] sm:$0xff]
        %v423 = vld [vmem:[%s338] sm:$0xff]
        %v424 = vld [vmem:[%s338 + $0x8] sm:$0xff]
        %v425 = vld [vmem:[%s338 + $0x10] sm:$0xff]
        %v426 = vld [vmem:[%s338 + $0x18] sm:$0xff]
        %v427 = vld [vmem:[%s358] sm:$0xff]
        %v428 = vld [vmem:[%s358 + $0x8] sm:$0xff]
        %v429 = vld [vmem:[%s358 + $0x10] sm:$0xff]
        %v430 = vld [vmem:[%s358 + $0x18] sm:$0xff]
        %v431 = vlaneseq
        %v432 = vshrl.u32 %v431, 7
        %v433 = vadd.s32 %v432, 8
        %v434 = vadd.s32 %v432, 16
        %s435 = smul.u32 %s33, 8
        %s436 = ssub.s32 %s435, 8
        %v437 = vstv %s436
        %v438 = vadd.s32 %v432, %v437
        %v439 = vadd.s32 %v433, %v437
        %v440 = vadd.s32 %v434, %v437
        %v441 = vlaneseq
        %v442 = vand.u32 %v441, 127
        %vm443 = vcmp.ge.s32.totalorder %v438, 0
        %vm444 = vcmp.ge.s32.totalorder %v439, 0
        %vm445 = vcmp.ge.s32.totalorder %v440, 0
        %vm446 = vcmp.lt.s32.totalorder %v438, 16
        %vm447 = vcmp.lt.s32.totalorder %v439, 16
        %vm448 = vcmp.lt.s32.totalorder %v440, 16
        %vm449 = vmand %vm443, %vm446
        %vm450 = vmand %vm444, %vm447
        %vm451 = vmand %vm445, %vm448
        %vm452 = vcmp.lt.s32.totalorder %v442, 16
        %vm453 = vmand %vm449, %vm452
        %vm454 = vmand %vm450, %vm452
        %vm455 = vmand %vm451, %vm452
        %v456 = vsel %vm453, 1, 0
        %v457 = vsel %vm454, 1, 0
        %v458 = vsel %vm455, 1, 0
        %vm459 = vcmp.eq.s32.totalorder %v456, 1
        %vm460 = vcmp.eq.s32.totalorder %v457, 1
        %vm461 = vcmp.eq.s32.totalorder %v458, 1
        %v462 = vsel %vm459, %v419, 0.0
        %v463 = vsel %vm460, %v423, 0.0
        %v464 = vsel %vm461, %v427, 0.0
        %v465 = vsel %vm459, %v420, 0.0
        %v466 = vsel %vm460, %v424, 0.0
        %v467 = vsel %vm461, %v428, 0.0
        %v468 = vsel %vm459, %v421, 0.0
        %v469 = vsel %vm460, %v425, 0.0
        %v470 = vsel %vm461, %v429, 0.0
        %v471 = vsel %vm459, %v422, 0.0
        %v472 = vsel %vm460, %v426, 0.0
        %v473 = vsel %vm461, %v430, 0.0
        %482 = vrot.lane.b32.xlu0 %v462, 1
        %v483 = vpop.permute.xlu0 %482
        %484 = vrot.lane.b32.xlu0 %v463, 1
        %v485 = vpop.permute.xlu0 %484
        %486 = vrot.lane.b32.xlu0 %v465, 1
        %v487 = vpop.permute.xlu0 %486
        %488 = vrot.lane.b32.xlu0 %v466, 1
        %v489 = vpop.permute.xlu0 %488
        %490 = vrot.lane.b32.xlu0 %v468, 1
        %v491 = vpop.permute.xlu0 %490
        %492 = vrot.lane.b32.xlu0 %v469, 1
        %v493 = vpop.permute.xlu0 %492
        %494 = vrot.lane.b32.xlu0 %v471, 1
        %v495 = vpop.permute.xlu0 %494
        %496 = vrot.lane.b32.xlu0 %v472, 1
        %v497 = vpop.permute.xlu0 %496
        %v506 = vld [vmem:[%s368] sm:$0xff]
        %v508 = vrot.slane %v506, 1
        %v510 = vmul.f32 %v483, %v508
        %v511 = vmul.f32 %v485, %v508
        %v512 = vmul.f32 %v487, %v508
        %v513 = vmul.f32 %v489, %v508
        %v514 = vmul.f32 %v491, %v508
        %v515 = vmul.f32 %v493, %v508
        %v516 = vmul.f32 %v495, %v508
        %v517 = vmul.f32 %v497, %v508
        %s518 = scalar_lea.vmem %s368, 8 [#allocation8]
        %v519 = vld [vmem:[%s518] sm:$0xff]
        %v521 = vrot.slane %v519, 1
        %v523 = vmul.f32 %v462, %v521
        %v524 = vmul.f32 %v463, %v521
        %v525 = vmul.f32 %v465, %v521
        %v526 = vmul.f32 %v466, %v521
        %v527 = vmul.f32 %v468, %v521
        %v528 = vmul.f32 %v469, %v521
        %v529 = vmul.f32 %v471, %v521
        %v530 = vmul.f32 %v472, %v521
        %v531 = vadd.f32 %v510, %v523
        %v532 = vadd.f32 %v511, %v524
        %v533 = vadd.f32 %v512, %v525
        %v534 = vadd.f32 %v513, %v526
        %v535 = vadd.f32 %v514, %v527
        %v536 = vadd.f32 %v515, %v528
        %v537 = vadd.f32 %v516, %v529
        %v538 = vadd.f32 %v517, %v530
        %539 = vrot.lane.b32.xlu0 %v462, 127
        %v540 = vpop.permute.xlu0 %539
        %541 = vrot.lane.b32.xlu0 %v463, 127
        %v542 = vpop.permute.xlu0 %541
        %543 = vrot.lane.b32.xlu0 %v465, 127
        %v544 = vpop.permute.xlu0 %543
        %545 = vrot.lane.b32.xlu0 %v466, 127
        %v546 = vpop.permute.xlu0 %545
        %547 = vrot.lane.b32.xlu0 %v468, 127
        %v548 = vpop.permute.xlu0 %547
        %549 = vrot.lane.b32.xlu0 %v469, 127
        %v550 = vpop.permute.xlu0 %549
        %551 = vrot.lane.b32.xlu0 %v471, 127
        %v552 = vpop.permute.xlu0 %551
        %553 = vrot.lane.b32.xlu0 %v472, 127
        %v554 = vpop.permute.xlu0 %553
        %s563 = scalar_lea.vmem %s368, 16 [#allocation8]
        %v564 = vld [vmem:[%s563] sm:$0xff]
        %v566 = vrot.slane %v564, 1
        %v568 = vmul.f32 %v540, %v566
        %v569 = vmul.f32 %v542, %v566
        %v570 = vmul.f32 %v544, %v566
        %v571 = vmul.f32 %v546, %v566
        %v572 = vmul.f32 %v548, %v566
        %v573 = vmul.f32 %v550, %v566
        %v574 = vmul.f32 %v552, %v566
        %v575 = vmul.f32 %v554, %v566
        %v576 = vadd.f32 %v531, %v568
        %v577 = vadd.f32 %v532, %v569
        %v578 = vadd.f32 %v533, %v570
        %v579 = vadd.f32 %v534, %v571
        %v580 = vadd.f32 %v535, %v572
        %v581 = vadd.f32 %v536, %v573
        %v582 = vadd.f32 %v537, %v574
        %v583 = vadd.f32 %v538, %v575
        %s584 = scalar_lea.vmem %s368, 24 [#allocation8]
        %v585 = vld [vmem:[%s584] sm:$0xff]
        %v586 = vmul.f32 %v485, %v585
        %v587 = vmul.f32 %v489, %v585
        %v588 = vmul.f32 %v493, %v585
        %v589 = vmul.f32 %v497, %v585
        %v594 = vrot.slane %v586, 1
        %v595 = vrot.slane %v587, 1
        %v596 = vrot.slane %v588, 1
        %v597 = vrot.slane %v589, 1
        %v602 = vadd.f32 %v576, %v594
        %v603 = vadd.f32 %v577, %v594
        %v604 = vadd.f32 %v578, %v595
        %v605 = vadd.f32 %v579, %v595
        %v606 = vadd.f32 %v580, %v596
        %v607 = vadd.f32 %v581, %v596
        %v608 = vadd.f32 %v582, %v597
        %v609 = vadd.f32 %v583, %v597
        %s610 = scalar_lea.vmem %s368, 32 [#allocation8]
        %v611 = vld [vmem:[%s610] sm:$0xff]
        %v612 = vmul.f32 %v463, %v611
        %v613 = vmul.f32 %v466, %v611
        %v614 = vmul.f32 %v469, %v611
        %v615 = vmul.f32 %v472, %v611
        %v620 = vrot.slane %v612, 1
        %v621 = vrot.slane %v613, 1
        %v622 = vrot.slane %v614, 1
        %v623 = vrot.slane %v615, 1
        %v628 = vadd.f32 %v602, %v620
        %v629 = vadd.f32 %v603, %v620
        %v630 = vadd.f32 %v604, %v621
        %v631 = vadd.f32 %v605, %v621
        %v632 = vadd.f32 %v606, %v622
        %v633 = vadd.f32 %v607, %v622
        %v634 = vadd.f32 %v608, %v623
        %v635 = vadd.f32 %v609, %v623
        %s636 = scalar_lea.vmem %s368, 40 [#allocation8]
        %v637 = vld [vmem:[%s636] sm:$0xff]
        %v638 = vmul.f32 %v542, %v637
        %v639 = vmul.f32 %v546, %v637
        %v640 = vmul.f32 %v550, %v637
        %v641 = vmul.f32 %v554, %v637
        %v646 = vrot.slane %v638, 1
        %v647 = vrot.slane %v639, 1
        %v648 = vrot.slane %v640, 1
        %v649 = vrot.slane %v641, 1
        %v654 = vadd.f32 %v628, %v646
        %v655 = vadd.f32 %v629, %v646
        %v656 = vadd.f32 %v630, %v647
        %v657 = vadd.f32 %v631, %v647
        %v658 = vadd.f32 %v632, %v648
        %v659 = vadd.f32 %v633, %v648
        %v660 = vadd.f32 %v634, %v649
        %v661 = vadd.f32 %v635, %v649
        %666 = vrot.lane.b32.xlu0 %v464, 1
        %v667 = vpop.permute.xlu0 %666
        %668 = vrot.lane.b32.xlu0 %v467, 1
        %v669 = vpop.permute.xlu0 %668
        %670 = vrot.lane.b32.xlu0 %v470, 1
        %v671 = vpop.permute.xlu0 %670
        %672 = vrot.lane.b32.xlu0 %v473, 1
        %v673 = vpop.permute.xlu0 %672
        %s678 = scalar_lea.vmem %s368, 48 [#allocation8]
        %v679 = vld [vmem:[%s678] sm:$0xff]
        %v681 = vrot.slane %v679, 7
        %v683 = vmul.f32 %v485, %v681
        %v684 = vmul.f32 %v667, %v681
        %v685 = vmul.f32 %v489, %v681
        %v686 = vmul.f32 %v669, %v681
        %v687 = vmul.f32 %v493, %v681
        %v688 = vmul.f32 %v671, %v681
        %v689 = vmul.f32 %v497, %v681
        %v690 = vmul.f32 %v673, %v681
        %vm699 = vcmask 1045504
        %v700 = vrot.slane %v683, 2
        %v701 = vrot.slane %v684, 2
        %v702 = vsel %vm699, %v700, %v701
        %v703 = vrot.slane %v685, 2
        %v704 = vrot.slane %v686, 2
        %v705 = vsel %vm699, %v703, %v704
        %v706 = vrot.slane %v687, 2
        %v707 = vrot.slane %v688, 2
        %v708 = vsel %vm699, %v706, %v707
        %v709 = vrot.slane %v689, 2
        %v710 = vrot.slane %v690, 2
        %v711 = vsel %vm699, %v709, %v710
        %v720 = vadd.f32 %v654, %v700
        %v721 = vadd.f32 %v655, %v702
        %v722 = vadd.f32 %v656, %v703
        %v723 = vadd.f32 %v657, %v705
        %v724 = vadd.f32 %v658, %v706
        %v725 = vadd.f32 %v659, %v708
        %v726 = vadd.f32 %v660, %v709
        %v727 = vadd.f32 %v661, %v711
        %s728 = scalar_lea.vmem %s368, 56 [#allocation8]
        %v729 = vld [vmem:[%s728] sm:$0xff]
        %v731 = vrot.slane %v729, 7
        %v733 = vmul.f32 %v463, %v731
        %v734 = vmul.f32 %v464, %v731
        %v735 = vmul.f32 %v466, %v731
        %v736 = vmul.f32 %v467, %v731
        %v737 = vmul.f32 %v469, %v731
        %v738 = vmul.f32 %v470, %v731
        %v739 = vmul.f32 %v472, %v731
        %v740 = vmul.f32 %v473, %v731
        %v749 = vrot.slane %v733, 2
        %v750 = vrot.slane %v734, 2
        %v751 = vsel %vm699, %v749, %v750
        %v752 = vrot.slane %v735, 2
        %v753 = vrot.slane %v736, 2
        %v754 = vsel %vm699, %v752, %v753
        %v755 = vrot.slane %v737, 2
        %v756 = vrot.slane %v738, 2
        %v757 = vsel %vm699, %v755, %v756
        %v758 = vrot.slane %v739, 2
        %v759 = vrot.slane %v740, 2
        %v760 = vsel %vm699, %v758, %v759
        %v769 = vadd.f32 %v720, %v749
        %v770 = vadd.f32 %v721, %v751
        %v771 = vadd.f32 %v722, %v752
        %v772 = vadd.f32 %v723, %v754
        %v773 = vadd.f32 %v724, %v755
        %v774 = vadd.f32 %v725, %v757
        %v775 = vadd.f32 %v726, %v758
        %v776 = vadd.f32 %v727, %v760
        %777 = vrot.lane.b32.xlu0 %v464, 127
        %v778 = vpop.permute.xlu0 %777
        %779 = vrot.lane.b32.xlu0 %v467, 127
        %v780 = vpop.permute.xlu0 %779
        %781 = vrot.lane.b32.xlu0 %v470, 127
        %v782 = vpop.permute.xlu0 %781
        %783 = vrot.lane.b32.xlu0 %v473, 127
        %v784 = vpop.permute.xlu0 %783
        %s789 = scalar_lea.vmem %s368, 64 [#allocation8]
        %v790 = vld [vmem:[%s789] sm:$0xff]
        %v792 = vrot.slane %v790, 7
        %v794 = vmul.f32 %v542, %v792
        %v795 = vmul.f32 %v778, %v792
        %v796 = vmul.f32 %v546, %v792
        %v797 = vmul.f32 %v780, %v792
        %v798 = vmul.f32 %v550, %v792
        %v799 = vmul.f32 %v782, %v792
        %v800 = vmul.f32 %v554, %v792
        %v801 = vmul.f32 %v784, %v792
        %v810 = vrot.slane %v794, 2
        %v811 = vrot.slane %v795, 2
        %v812 = vsel %vm699, %v810, %v811
        %v813 = vrot.slane %v796, 2
        %v814 = vrot.slane %v797, 2
        %v815 = vsel %vm699, %v813, %v814
        %v816 = vrot.slane %v798, 2
        %v817 = vrot.slane %v799, 2
        %v818 = vsel %vm699, %v816, %v817
        %v819 = vrot.slane %v800, 2
        %v820 = vrot.slane %v801, 2
        %v821 = vsel %vm699, %v819, %v820
        %v830 = vadd.f32 %v769, %v810
        %v831 = vadd.f32 %v770, %v812
        %v832 = vadd.f32 %v771, %v813
        %v833 = vadd.f32 %v772, %v815
        %v834 = vadd.f32 %v773, %v816
        %v835 = vadd.f32 %v774, %v818
        %v836 = vadd.f32 %v775, %v819
        %v837 = vadd.f32 %v776, %v821
        %838 = vst [vmem:[%s408 - $0x7] sm:$0x80] %v830
        %839 = vst [vmem:[%s408 + $0x1] sm:$0x7f] %v831
        %840 = vst [vmem:[%s408 + $0x1] sm:$0x80] %v832
        %841 = vst [vmem:[%s408 + $0x9] sm:$0x7f] %v833
        %842 = vst [vmem:[%s408 + $0x9] sm:$0x80] %v834
        %843 = vst [vmem:[%s408 + $0x11] sm:$0x7f] %v835
        %844 = vst [vmem:[%s408 + $0x11] sm:$0x80] %v836
        %845 = vst [vmem:[%s408 + $0x19] sm:$0x7f] %v837
        %s846 = sand.u32 %s188, 1
        %s847 = scalar_lea.sflag [#allocation4], %s846
        %s848 = sand.u32 %s188, 1
        %s849 = smul.addr %s848, 32
        %s850 = scalar_lea.vmem [#allocation10], %s849
        // Predicated region
        $region53: #{tpu_custom_call.1} parent=35 // pred_check
          %p851 = pneg %p198
        $region54: #{tpu_custom_call.1} parent=35 // pred_check_branch
          %853 = sbr.rel (%p851) target = $region56
        $region55: #{tpu_custom_call.1} parent=35 // pred_region
          %s854 = smul.u32 4, %s34
          %856 = vsyncadd %s847, 0
          %s857 = smul.addr %s854, 2
          %s858 = sadd.s32 %s33, %s857
          %s859 = smul.addr %s32, 8
          %s860 = sadd.s32 %s858, %s859
          %s861 = smul.addr %s860, 8
          %s862 = scalar_lea.hbm %s4, %s861
          %s863 = sshll.u32 %s850, 4
          %s864 = int_to_ptr.vmem [resolvable:$true] %s863
          %s865 = sshll.u32 %s862, 4
          %s866 = int_to_ptr.hbm [resolvable:$true] %s865
          %871 = dma.vmem_to_hbm [thread:$0]  %s864, 512, %s866, %s847, 128, 256, 8
        $region56: #{tpu_custom_call.1} parent=35 // pred_fallthru
          _
      $region36: #{tpu_custom_call.1} parent=5 // pred_fallthru
        _
      %p872 = scmp.le.s32.totalorder 2, %s22
      // Predicated region
      $region57: #{tpu_custom_call.1} parent=5 // pred_check
        %p873 = pneg %p872
      $region58: #{tpu_custom_call.1} parent=5 // pred_check_branch
        %875 = sbr.rel (%p873) target = $region60
      $region59: #{tpu_custom_call.1} parent=5 // pred_region
        %s876 = ssub.s32 %s22, 2
        // Predicated region
        $region61: #{tpu_custom_call.1} parent=59 // pred_check
          %p877 = pneg %p204
        $region62: #{tpu_custom_call.1} parent=59 // pred_check_branch
          %879 = sbr.rel (%p877) target = $region64
        $region63: #{tpu_custom_call.1} parent=59 // pred_region
          %s880 = sand.u32 %s189, 1
          %s881 = scalar_lea.sflag [#allocation4], %s880
          %s882 = sand.u32 %s189, 1
          %s883 = smul.addr %s882, 32
          %s884 = scalar_lea.vmem [#allocation10], %s883
          %886 = dma.done %s881, 512
        $region64: #{tpu_custom_call.1} parent=59 // pred_fallthru
          _
      $region60: #{tpu_custom_call.1} parent=5 // pred_fallthru
        _
    $region6: #{tpu_custom_call.1} parent=1 // loop_footer
      %s26 = sadd.s32 1, %s22
    $region7: #{tpu_custom_call.1} parent=1 // loop_footer_branch
      %21 = sbr.rel target = $region3
    $region8: #{tpu_custom_call.1} parent=1 // loop_exit
      _
    %887 = vsyncpa [#allocation3], 1
    %s888 = scalar_lea.sflag [#allocation3], 1
    %889 = vsyncpa %s888, 1
    %890 = vsyncpa [#allocation6], 1
    %s891 = scalar_lea.sflag [#allocation6], 1
    %892 = vsyncpa %s891, 1
    %893 = vsyncpa [#allocation9], 1
    %s894 = scalar_lea.sflag [#allocation9], 1
    %895 = vsyncpa %s894, 1
    %896 = vsyncpa [#allocation4], 1
    %s897 = scalar_lea.sflag [#allocation4], 1
    %898 = vsyncpa %s897, 1

</llo_original>
